<compile_context>
chip_gen: v7x
topology: tpu7x:2x2x1
jax: 0.10.0
libtpu: 0.0.40
codegen_flags: <defaults>
</compile_context>

<pallas_src>
import functools

import jax
import jax.numpy as jnp
from jax.experimental import pallas as pl
from jax.experimental.pallas import tpu as pltpu


def _round_up(x: int, m: int) -> int:
    return (x + m - 1) // m * m


# ----------------------------------------------------------------------------- kernels
def _fc_kernel_acc_out(s_ref, x_ref, v_ref, b_ref, o_ref):
    """f32 output: accumulate directly into the K-resident output tile (no scratch)."""
    k = pl.program_id(2)

    @pl.when(k == 0)
    def _init():
        o_ref[...] = jnp.zeros_like(o_ref)

    # Dropout(p=0) is identity; fuse ReLU with the matmul on the VMEM-resident tile.
    x = jnp.maximum(x_ref[...], 0)
    # x: (tm, tk), v: (tk, tn) -- plain NN contraction (V pre-transposed in the wrapper).
    o_ref[...] += jnp.dot(x, v_ref[...], preferred_element_type=jnp.float32)

    @pl.when(k == pl.num_programs(2) - 1)
    def _finalize():
        o_ref[...] = o_ref[...] * s_ref[0] + b_ref[...]


def _fc_kernel_scratch(s_ref, x_ref, v_ref, b_ref, o_ref, acc_ref):
    """Narrow (e.g. bf16) output: f32 VMEM scratch accumulator, cast at finalize."""
    k = pl.program_id(2)

    @pl.when(k == 0)
    def _init():
        acc_ref[...] = jnp.zeros_like(acc_ref)

    x = jnp.maximum(x_ref[...], 0)
    acc_ref[...] += jnp.dot(x, v_ref[...], preferred_element_type=jnp.float32)

    @pl.when(k == pl.num_programs(2) - 1)
    def _finalize():
        o_ref[...] = (acc_ref[...] * s_ref[0] + b_ref[...]).astype(o_ref.dtype)


# --------------------------------------------------------------------- device defaults
@functools.lru_cache(maxsize=1)
def _device_defaults():
    """Generation-tuned tile sizes / VMEM budget / matmul operand dtype."""
    kind = ""
    try:
        kind = jax.devices()[0].device_kind.lower()
    except Exception:  # pragma: no cover - defensive
        pass
    if ("v5e" in kind) or ("v5 lite" in kind) or ("v5lite" in kind):
        # v5e MXU has no f32 mode -> cast matmul operands to bf16 (f32 accumulation kept).
        return dict(tm=512, tn=512, tk=1024, vmem=96 << 20,
                    compute_dtype="bfloat16", multi_tile=False)
    if "v6" in kind:
        return dict(tm=1024, tn=1024, tk=1024, vmem=100 << 20,
                    compute_dtype=None, multi_tile=False)
    if "7" in kind:
        # v7x: only 64 MiB physical VMEM, but 2 TensorCores -> keep >=2 (M,N) tiles.
        return dict(tm=768, tn=768, tk=1024, vmem=48 << 20,
                    compute_dtype=None, multi_tile=True)
    # Unknown / other generations: conservative but still much larger than 256x256.
    return dict(tm=512, tn=512, tk=1024, vmem=48 << 20,
                compute_dtype=None, multi_tile=False)


# --------------------------------------------------------------------------- forward
@functools.partial(
    jax.jit,
    static_argnames=("tm", "tn", "tk", "compute_dtype", "vmem_limit_bytes", "multi_tile"),
)
def _fc_layer_forward_impl(x, v, g, bias, *, tm, tn, tk, compute_dtype,
                           vmem_limit_bytes, multi_tile):
    B, D_in = x.shape
    D_out = v.shape[0]
    out_dtype = x.dtype
    cdt = x.dtype if compute_dtype is None else jnp.dtype(compute_dtype)

    # Weight-norm scale (Frobenius norm over the whole V, matching dim=None), computed
    # from the f32 view of the master weights (not the bf16 cast used for the matmul).
    # NOTE: like PyTorch's weight_norm, no epsilon -> an all-zero V gives inf/nan.
    s = (g / jnp.sqrt(jnp.sum(jnp.square(v.astype(jnp.float32))))).astype(jnp.float32)
    s = s.reshape(1)

    # Clamp tile sizes for small problems, preserving TPU (8, 128) alignment.
    tm = min(tm, _round_up(B, 8))
    tn = min(tn, _round_up(D_out, 128))
    tk = min(tk, _round_up(D_in, 128))

    # v7x: guarantee >=2 output tiles on the "parallel" (M, N) axes so both TCs run.
    if multi_tile and (_round_up(B, tm) // tm) * (_round_up(D_out, tn) // tn) < 2:
        tn_half = _round_up(_round_up(D_out, 128) // 2, 128)
        tm_half = _round_up(_round_up(B, 8) // 2, 8)
        if tn_half < tn:
            tn = tn_half
        elif tm_half < tm:
            tm = tm_half

    Bp = _round_up(B, tm)
    Kp = _round_up(D_in, tk)
    Np = _round_up(D_out, tn)

    # x: pad + (optional) cast in one wrapper pass.
    xp = x
    if Bp != B or Kp != D_in:
        xp = jnp.pad(xp, ((0, Bp - B), (0, Kp - D_in)))
    if xp.dtype != cdt:
        xp = xp.astype(cdt)

    # V: transpose once to (Kp, Np) so the kernel contraction needs no per-step vxpose;
    # pad + cast are folded into the same copy.
    vt = v.T
    if Kp != D_in or Np != D_out:
        vt = jnp.pad(vt, ((0, Kp - D_in), (0, Np - D_out)))
    if vt.dtype != cdt:
        vt = vt.astype(cdt)

    bp = bias.astype(jnp.float32)  # bias add stays in f32 on the accumulator
    if Np != D_out:
        bp = jnp.pad(bp, (0, Np - D_out))
    bp = bp.reshape(1, Np)

    grid = (Bp // tm, Np // tn, Kp // tk)

    use_scratch = jnp.dtype(out_dtype) != jnp.dtype(jnp.float32)
    kernel = _fc_kernel_scratch if use_scratch else _fc_kernel_acc_out
    scratch_shapes = [pltpu.VMEM((tm, tn), jnp.float32)] if use_scratch else []

    out = pl.pallas_call(
        kernel,
        out_shape=jax.ShapeDtypeStruct((Bp, Np), out_dtype),
        grid_spec=pltpu.PrefetchScalarGridSpec(
            num_scalar_prefetch=0,
            grid=grid,
            in_specs=[
                # weight-norm scale: 4-byte scalar kept in SMEM
                pl.BlockSpec(memory_space=pltpu.MemorySpace.SMEM),
                pl.BlockSpec((tm, tk), lambda i, j, k: (i, k)),   # x tile
                pl.BlockSpec((tk, tn), lambda i, j, k: (k, j)),   # V^T tile (in, out)
                pl.BlockSpec((1, tn), lambda i, j, k: (0, j)),    # bias tile (N-indexed)
            ],
            out_specs=pl.BlockSpec((tm, tn), lambda i, j, k: (i, j)),
            scratch_shapes=scratch_shapes,
        ),
        compiler_params=pltpu.CompilerParams(
            dimension_semantics=("parallel", "parallel", "arbitrary"),
            vmem_limit_bytes=vmem_limit_bytes,
        ),
    )(s, xp, vt, bp)

    return out[:B, :D_out]


def fc_layer_forward(x, v, g, bias, *, tm=None, tn=None, tk=None,
                     compute_dtype="auto", vmem_limit_bytes=None):
    """relu(x) @ (g * V / ||V||_F).T + bias via a tiled Pallas TPU kernel.

    x: (B, D_in); v: (D_out, D_in); g: scalar; bias: (D_out,).
    Tile sizes / VMEM budget / matmul operand dtype default to the detected TPU
    generation (see _device_defaults).
    """
    d = _device_defaults()
    tm = d["tm"] if tm is None else tm
    tn = d["tn"] if tn is None else tn
    tk = d["tk"] if tk is None else tk
    vmem_limit_bytes = d["vmem"] if vmem_limit_bytes is None else vmem_limit_bytes
    if compute_dtype == "auto":
        compute_dtype = d["compute_dtype"]
    if compute_dtype is not None:
        compute_dtype = jnp.dtype(compute_dtype).name  # hashable static arg
    return _fc_layer_forward_impl(
        x, v, g, bias,
        tm=int(tm), tn=int(tn), tk=int(tk),
        compute_dtype=compute_dtype,
        vmem_limit_bytes=int(vmem_limit_bytes),
        multi_tile=bool(d["multi_tile"]),
    )


def fc_layer_reference(x, v, g, bias):
    w = g * v / jnp.sqrt(jnp.sum(jnp.square(v)))
    return jnp.maximum(x, 0.0) @ w.T + bias


if __name__ == "__main__":
    key = jax.random.PRNGKey(0)
    k1, k2, k3, k4, k5, k6 = jax.random.split(key, 6)

    d = _device_defaults()
    f32_compute = d["compute_dtype"] is None  # v5e defaults cast operands to bf16
    tol = dict(atol=2e-3, rtol=2e-3) if f32_compute else dict(atol=5e-2, rtol=5e-2)

    # --- Case 1: aligned shapes, f32 inputs, device-tuned default tiles --------------
    B, D_in, D_out = 64, 512, 256
    x = jax.random.normal(k1, (B, D_in), dtype=jnp.float32)
    v = jax.random.normal(k2, (D_out, D_in), dtype=jnp.float32) * 0.05
    g = jnp.sqrt(jnp.sum(jnp.square(v)))  # W == V at init, as in PyTorch weight_norm
    b = jax.random.normal(k3, (D_out,), dtype=jnp.float32) * 0.1

    y = fc_layer_forward(x, v, g, b)
    jax.block_until_ready(y)
    y_ref = fc_layer_reference(x, v, g, b)
    assert jnp.allclose(y, y_ref, **tol), "case 1 (f32, default tiles) mismatch"

    # --- Case 2: ragged shapes + small explicit tiles (multi-step M/N/K grid) --------
    B2, D_in2, D_out2 = 10, 300, 200
    x2 = jax.random.normal(k4, (B2, D_in2), dtype=jnp.float32)
    v2 = jax.random.normal(k5, (D_out2, D_in2), dtype=jnp.float32) * 0.1
    g2 = jnp.float32(1.7)
    b2 = jax.random.normal(k6, (D_out2,), dtype=jnp.float32) * 0.1

    y2 = fc_layer_forward(x2, v2, g2, b2, tm=8, tn=128, tk=128)
    jax.block_until_ready(y2)
    y2_ref = fc_layer_reference(x2, v2, g2, b2)
    assert jnp.allclose(y2, y2_ref, **tol), "case 2 (ragged, small tiles) mismatch"

    # --- Case 3: bf16 inputs/outputs (scratch-accumulator path, MXU-peak dtypes) -----
    y3 = fc_layer_forward(x.astype(jnp.bfloat16), v.astype(jnp.bfloat16), g, b)
    jax.block_until_ready(y3)
    assert jnp.allclose(y3.astype(jnp.float32), y_ref, atol=5e-2, rtol=5e-2), \
        "case 3 (bf16) mismatch"

    print("KERNEL_OK")
</pallas_src>

<mosaic_0001>
module attributes {stable_mosaic.version = 11 : i64} {
  func.func @_fc_kernel_acc_out(%arg0: i32, %arg1: i32, %arg2: i32, %arg3: memref<1xf32, #tpu.memory_space<smem>>, %arg4: memref<64x512xf32, #tpu.memory_space<vmem>>, %arg5: memref<512x256xf32, #tpu.memory_space<vmem>>, %arg6: memref<1x256xf32, #tpu.memory_space<vmem>>, %arg7: memref<64x256xf32, #tpu.memory_space<vmem>>) attributes {dimension_semantics = [#tpu.dimension_semantics<parallel>, #tpu.dimension_semantics<parallel>, #tpu.dimension_semantics<arbitrary>], iteration_bounds = array<i64: 1, 1, 1>, scalar_prefetch = 0 : i64, scratch_operands = 0 : i64, tpu.core_type = #tpu.core_type<tc>, window_params = [{transform_indices = @transform_0, window_bounds = array<i64: 1>}, {transform_indices = @transform_1, window_bounds = array<i64: 64, 512>}, {transform_indices = @transform_2, window_bounds = array<i64: 512, 256>}, {transform_indices = @transform_3, window_bounds = array<i64: 1, 256>}, {transform_indices = @transform_4, window_bounds = array<i64: 64, 256>}]} {
    %c0_i32 = arith.constant 0 : i32
    %0 = arith.cmpi eq, %arg2, %c0_i32 : i32
    %1 = arith.extui %0 : i1 to i32
    %c0_i32_0 = arith.constant 0 : i32
    %2 = arith.cmpi ne, %1, %c0_i32_0 : i32
    scf.if %2 {
      %cst_11 = arith.constant 0.000000e+00 : f32
      %14 = vector.broadcast %cst_11 : f32 to vector<64x256xf32>
      %c0_12 = arith.constant 0 : index
      %c0_13 = arith.constant 0 : index
      %15 = vector.load %arg7[%c0_12, %c0_13] : memref<64x256xf32, #tpu.memory_space<vmem>>, vector<64x256xf32>
      tpu.vector_store %arg7[%c0_12, %c0_13], %14 {strides = array<i32>} : memref<64x256xf32, #tpu.memory_space<vmem>>, vector<64x256xf32>,
    } else {
    }
    %c0 = arith.constant 0 : index
    %c0_1 = arith.constant 0 : index
    %3 = vector.load %arg4[%c0, %c0_1] : memref<64x512xf32, #tpu.memory_space<vmem>>, vector<64x512xf32>
    %cst = arith.constant 0.000000e+00 : f32
    %4 = vector.broadcast %cst : f32 to vector<64x512xf32>
    %5 = arith.maximumf %3, %4 : vector<64x512xf32>
    %c0_2 = arith.constant 0 : index
    %c0_3 = arith.constant 0 : index
    %6 = vector.load %arg7[%c0_2, %c0_3] : memref<64x256xf32, #tpu.memory_space<vmem>>, vector<64x256xf32>
    %c0_4 = arith.constant 0 : index
    %c0_5 = arith.constant 0 : index
    %7 = vector.load %arg5[%c0_4, %c0_5] : memref<512x256xf32, #tpu.memory_space<vmem>>, vector<512x256xf32>
    %cst_6 = arith.constant dense<0.000000e+00> : vector<64x256xf32>
    %8 = tpu.matmul %5, %7, %cst_6 {dimension_numbers = #tpu.dot_dimension_numbers<[1], [0], [0], [1], [0, 0, 1, 1], [], []>} : vector<64x512xf32>, vector<512x256xf32>, vector<64x256xf32> -> vector<64x256xf32>
    %9 = arith.addf %6, %8 : vector<64x256xf32>
    %c0_7 = arith.constant 0 : index
    %c0_8 = arith.constant 0 : index
    %10 = vector.load %arg7[%c0_7, %c0_8] : memref<64x256xf32, #tpu.memory_space<vmem>>, vector<64x256xf32>
    tpu.vector_store %arg7[%c0_7, %c0_8], %9 {strides = array<i32>} : memref<64x256xf32, #tpu.memory_space<vmem>>, vector<64x256xf32>,
    %c0_i32_9 = arith.constant 0 : i32
    %11 = arith.cmpi eq, %arg2, %c0_i32_9 : i32
    %12 = arith.extui %11 : i1 to i32
    %c0_i32_10 = arith.constant 0 : i32
    %13 = arith.cmpi ne, %12, %c0_i32_10 : i32
    scf.if %13 {
      %c0_11 = arith.constant 0 : index
      %c0_12 = arith.constant 0 : index
      %14 = vector.load %arg7[%c0_11, %c0_12] : memref<64x256xf32, #tpu.memory_space<vmem>>, vector<64x256xf32>
      %c0_13 = arith.constant 0 : index
      %15 = memref.load %arg3[%c0_13] : memref<1xf32, #tpu.memory_space<smem>>
      %16 = vector.broadcast %15 : f32 to vector<64x256xf32>
      %17 = arith.mulf %14, %16 : vector<64x256xf32>
      %c0_14 = arith.constant 0 : index
      %c0_15 = arith.constant 0 : index
      %18 = vector.load %arg6[%c0_14, %c0_15] : memref<1x256xf32, #tpu.memory_space<vmem>>, vector<1x256xf32>
      %19 = vector.broadcast %18 : vector<1x256xf32> to vector<64x256xf32>
      %20 = arith.addf %17, %19 : vector<64x256xf32>
      %c0_16 = arith.constant 0 : index
      %c0_17 = arith.constant 0 : index
      %21 = vector.load %arg7[%c0_16, %c0_17] : memref<64x256xf32, #tpu.memory_space<vmem>>, vector<64x256xf32>
      tpu.vector_store %arg7[%c0_16, %c0_17], %20 {strides = array<i32>} : memref<64x256xf32, #tpu.memory_space<vmem>>, vector<64x256xf32>,
    } else {
    }
    return
  }
  func.func @transform_0(%arg0: i32, %arg1: i32, %arg2: i32) -> i32 {
    %c0_i32 = arith.constant 0 : i32
    %c0_i32_0 = arith.constant 0 : i32
    return %c0_i32 : i32
  }
  func.func @transform_1(%arg0: i32, %arg1: i32, %arg2: i32) -> (i32, i32) {
    %c0_i32 = arith.constant 0 : i32
    return %arg0, %arg2 : i32, i32
  }
  func.func @transform_2(%arg0: i32, %arg1: i32, %arg2: i32) -> (i32, i32) {
    %c0_i32 = arith.constant 0 : i32
    return %arg2, %arg1 : i32, i32
  }
  func.func @transform_3(%arg0: i32, %arg1: i32, %arg2: i32) -> (i32, i32) {
    %c0_i32 = arith.constant 0 : i32
    %c0_i32_0 = arith.constant 0 : i32
    return %c0_i32, %arg1 : i32, i32
  }
  func.func @transform_4(%arg0: i32, %arg1: i32, %arg2: i32) -> (i32, i32) {
    %c0_i32 = arith.constant 0 : i32
    return %arg0, %arg1 : i32, i32
  }
}

</mosaic_0001>

<llo_original>
// kernel: _fc_layer_forward_impl.1
$region0: #{_fc_layer_forward_impl.1}
  #allocation0 [shape = 'u32[]', space=smem, size = 0x4, offset = 0x4, fixed_abs, tag = 'smem constant byte address 0x4 - core index']
  #allocation1 [shape = 'u32[144,128]{1,0:T(1,128)}', space=vmem, size = 0x12000, scoped, tag = 'internal scratch']
  #allocation2 [shape = 'f32[1]{0:T(128)S(6)}', space=smem, size = 0x200, scoped, tag = 'scoped memory for _fc_layer_forward_impl.1']
  %s0 = inlined_call_operand.<no memory space> [shape: f32[1], index: 0, kind: input, shape index: {}]
  %s1 = inlined_call_operand.vmem [shape: f32[64,512], index: 1, kind: input, shape index: {}]
  %s2 = inlined_call_operand.vmem [shape: f32[512,256], index: 2, kind: input, shape index: {}]
  %s3 = inlined_call_operand.vmem [shape: f32[1,256], index: 3, kind: input, shape index: {}]
  %s4 = inlined_call_operand.hbm [shape: f32[64,256], index: 4, kind: output, shape index: {}]
  %s5 = sld [smem:[#allocation0]]
  $region34: #{_fc_layer_forward_impl.1} parent=0
    _
  %s7 = ssub.s32 1, %s5
  %s8 = scalar_select 0, %s7, %s5
  %9 = sst [smem:[#allocation2]] %s0
  $region1: #{_fc_layer_forward_impl.1} parent=0
    #allocation3 [shape = 'u8[65536]{0}', space=vmem, size = 0x10000, scoped, tag = 'output window, operand 0, single buffered']
    #allocation4 [shape = 's32[1]{0}', space=sflag, size = 0x4, scoped, tag = 'scoped memory for _fc_layer_forward_impl.1']
    %10 = vsyncpa [#allocation4], 0
    // Predicated region
    $region2: #{_fc_layer_forward_impl.1} parent=1 // pred_check
      _
    $region3: #{_fc_layer_forward_impl.1} parent=1 // pred_check_branch
      %12 = sbr.rel (0) target = $region5
    $region4: #{_fc_layer_forward_impl.1} parent=1 // pred_region
      _
    $region5: #{_fc_layer_forward_impl.1} parent=1 // pred_fallthru
      _
    // Predicated region
    $region6: #{_fc_layer_forward_impl.1} parent=1 // pred_check
      _
    $region7: #{_fc_layer_forward_impl.1} parent=1 // pred_check_branch
      %14 = sbr.rel (0) target = $region9
    $region8: #{_fc_layer_forward_impl.1} parent=1 // pred_region
      _
    $region9: #{_fc_layer_forward_impl.1} parent=1 // pred_fallthru
      _
    // Predicated region
    $region10: #{_fc_layer_forward_impl.1} parent=1 // pred_check
      _
    $region11: #{_fc_layer_forward_impl.1} parent=1 // pred_check_branch
      %16 = sbr.rel (0) target = $region13
    $region12: #{_fc_layer_forward_impl.1} parent=1 // pred_region
      _
    $region13: #{_fc_layer_forward_impl.1} parent=1 // pred_fallthru
      _
    // Predicated region
    $region14: #{_fc_layer_forward_impl.1} parent=1 // pred_check
      _
    $region15: #{_fc_layer_forward_impl.1} parent=1 // pred_check_branch
      %18 = sbr.rel (0) target = $region17
    $region16: #{_fc_layer_forward_impl.1} parent=1 // pred_region
      _
    $region17: #{_fc_layer_forward_impl.1} parent=1 // pred_fallthru
      _
    %p19 = scmp.eq.s32.totalorder 0, 0
    // Predicated region
    $region18: #{_fc_layer_forward_impl.1} parent=1 // pred_check
      %p20 = pneg %p19
    $region19: #{_fc_layer_forward_impl.1} parent=1 // pred_check_branch
      %22 = sbr.rel (%p20) target = $region21
    $region20: #{_fc_layer_forward_impl.1} parent=1 // pred_region
      %23 = vst [vmem:[#allocation3] sm:$0xff] 0.0
      %24 = vst [vmem:[#allocation3 + $0x8] sm:$0xff] 0.0
      %25 = vst [vmem:[#allocation3 + $0x10] sm:$0xff] 0.0
      %26 = vst [vmem:[#allocation3 + $0x18] sm:$0xff] 0.0
      %27 = vst [vmem:[#allocation3 + $0x20] sm:$0xff] 0.0
      %28 = vst [vmem:[#allocation3 + $0x28] sm:$0xff] 0.0
      %29 = vst [vmem:[#allocation3 + $0x30] sm:$0xff] 0.0
      %30 = vst [vmem:[#allocation3 + $0x38] sm:$0xff] 0.0
      %31 = vst [vmem:[#allocation3 + $0x40] sm:$0xff] 0.0
      %32 = vst [vmem:[#allocation3 + $0x48] sm:$0xff] 0.0
      %33 = vst [vmem:[#allocation3 + $0x50] sm:$0xff] 0.0
      %34 = vst [vmem:[#allocation3 + $0x58] sm:$0xff] 0.0
      %35 = vst [vmem:[#allocation3 + $0x60] sm:$0xff] 0.0
      %36 = vst [vmem:[#allocation3 + $0x68] sm:$0xff] 0.0
      %37 = vst [vmem:[#allocation3 + $0x70] sm:$0xff] 0.0
      %38 = vst [vmem:[#allocation3 + $0x78] sm:$0xff] 0.0
    $region21: #{_fc_layer_forward_impl.1} parent=1 // pred_fallthru
      _
    %v39 = vld [vmem:[%s1] sm:$0xff]
    %v40 = vld [vmem:[%s1 + $0x8] sm:$0xff]
    %v41 = vld [vmem:[%s1 + $0x10] sm:$0xff]
    %v42 = vld [vmem:[%s1 + $0x18] sm:$0xff]
    %v43 = vld [vmem:[%s1 + $0x20] sm:$0xff]
    %v44 = vld [vmem:[%s1 + $0x28] sm:$0xff]
    %v45 = vld [vmem:[%s1 + $0x30] sm:$0xff]
    %v46 = vld [vmem:[%s1 + $0x38] sm:$0xff]
    %v47 = vld [vmem:[%s1 + $0x40] sm:$0xff]
    %v48 = vld [vmem:[%s1 + $0x48] sm:$0xff]
    %v49 = vld [vmem:[%s1 + $0x50] sm:$0xff]
    %v50 = vld [vmem:[%s1 + $0x58] sm:$0xff]
    %v51 = vld [vmem:[%s1 + $0x60] sm:$0xff]
    %v52 = vld [vmem:[%s1 + $0x68] sm:$0xff]
    %v53 = vld [vmem:[%s1 + $0x70] sm:$0xff]
    %v54 = vld [vmem:[%s1 + $0x78] sm:$0xff]
    %v55 = vld [vmem:[%s1 + $0x80] sm:$0xff]
    %v56 = vld [vmem:[%s1 + $0x88] sm:$0xff]
    %v57 = vld [vmem:[%s1 + $0x90] sm:$0xff]
    %v58 = vld [vmem:[%s1 + $0x98] sm:$0xff]
    %v59 = vld [vmem:[%s1 + $0xa0] sm:$0xff]
    %v60 = vld [vmem:[%s1 + $0xa8] sm:$0xff]
    %v61 = vld [vmem:[%s1 + $0xb0] sm:$0xff]
    %v62 = vld [vmem:[%s1 + $0xb8] sm:$0xff]
    %v63 = vld [vmem:[%s1 + $0xc0] sm:$0xff]
    %v64 = vld [vmem:[%s1 + $0xc8] sm:$0xff]
    %v65 = vld [vmem:[%s1 + $0xd0] sm:$0xff]
    %v66 = vld [vmem:[%s1 + $0xd8] sm:$0xff]
    %v67 = vld [vmem:[%s1 + $0xe0] sm:$0xff]
    %v68 = vld [vmem:[%s1 + $0xe8] sm:$0xff]
    %v69 = vld [vmem:[%s1 + $0xf0] sm:$0xff]
    %v70 = vld [vmem:[%s1 + $0xf8] sm:$0xff]
    %v71 = vmax.f32 %v39, 0.0
    %v72 = vmax.f32 %v40, 0.0
    %v73 = vmax.f32 %v41, 0.0
    %v74 = vmax.f32 %v42, 0.0
    %v75 = vmax.f32 %v43, 0.0
    %v76 = vmax.f32 %v44, 0.0
    %v77 = vmax.f32 %v45, 0.0
    %v78 = vmax.f32 %v46, 0.0
    %v79 = vmax.f32 %v47, 0.0
    %v80 = vmax.f32 %v48, 0.0
    %v81 = vmax.f32 %v49, 0.0
    %v82 = vmax.f32 %v50, 0.0
    %v83 = vmax.f32 %v51, 0.0
    %v84 = vmax.f32 %v52, 0.0
    %v85 = vmax.f32 %v53, 0.0
    %v86 = vmax.f32 %v54, 0.0
    %v87 = vmax.f32 %v55, 0.0
    %v88 = vmax.f32 %v56, 0.0
    %v89 = vmax.f32 %v57, 0.0
    %v90 = vmax.f32 %v58, 0.0
    %v91 = vmax.f32 %v59, 0.0
    %v92 = vmax.f32 %v60, 0.0
    %v93 = vmax.f32 %v61, 0.0
    %v94 = vmax.f32 %v62, 0.0
    %v95 = vmax.f32 %v63, 0.0
    %v96 = vmax.f32 %v64, 0.0
    %v97 = vmax.f32 %v65, 0.0
    %v98 = vmax.f32 %v66, 0.0
    %v99 = vmax.f32 %v67, 0.0
    %v100 = vmax.f32 %v68, 0.0
    %v101 = vmax.f32 %v69, 0.0
    %v102 = vmax.f32 %v70, 0.0
    %v103 = vld [vmem:[#allocation3] sm:$0xff]
    %v104 = vld [vmem:[#allocation3 + $0x8] sm:$0xff]
    %v105 = vld [vmem:[#allocation3 + $0x10] sm:$0xff]
    %v106 = vld [vmem:[#allocation3 + $0x18] sm:$0xff]
    %v107 = vld [vmem:[#allocation3 + $0x20] sm:$0xff]
    %v108 = vld [vmem:[#allocation3 + $0x28] sm:$0xff]
    %v109 = vld [vmem:[#allocation3 + $0x30] sm:$0xff]
    %v110 = vld [vmem:[#allocation3 + $0x38] sm:$0xff]
    %v111 = vld [vmem:[#allocation3 + $0x40] sm:$0xff]
    %v112 = vld [vmem:[#allocation3 + $0x48] sm:$0xff]
    %v113 = vld [vmem:[#allocation3 + $0x50] sm:$0xff]
    %v114 = vld [vmem:[#allocation3 + $0x58] sm:$0xff]
    %v115 = vld [vmem:[#allocation3 + $0x60] sm:$0xff]
    %v116 = vld [vmem:[#allocation3 + $0x68] sm:$0xff]
    %v117 = vld [vmem:[#allocation3 + $0x70] sm:$0xff]
    %v118 = vld [vmem:[#allocation3 + $0x78] sm:$0xff]
    %v119 = vld [vmem:[%s2] sm:$0xff]
    %v120 = vld [vmem:[%s2 + $0x8] sm:$0xff]
    %v121 = vld [vmem:[%s2 + $0x10] sm:$0xff]
    %v122 = vld [vmem:[%s2 + $0x18] sm:$0xff]
    %v123 = vld [vmem:[%s2 + $0x20] sm:$0xff]
    %v124 = vld [vmem:[%s2 + $0x28] sm:$0xff]
    %v125 = vld [vmem:[%s2 + $0x30] sm:$0xff]
    %v126 = vld [vmem:[%s2 + $0x38] sm:$0xff]
    %v127 = vld [vmem:[%s2 + $0x40] sm:$0xff]
    %v128 = vld [vmem:[%s2 + $0x48] sm:$0xff]
    %v129 = vld [vmem:[%s2 + $0x50] sm:$0xff]
    %v130 = vld [vmem:[%s2 + $0x58] sm:$0xff]
    %v131 = vld [vmem:[%s2 + $0x60] sm:$0xff]
    %v132 = vld [vmem:[%s2 + $0x68] sm:$0xff]
    %v133 = vld [vmem:[%s2 + $0x70] sm:$0xff]
    %v134 = vld [vmem:[%s2 + $0x78] sm:$0xff]
    %v135 = vld [vmem:[%s2 + $0x80] sm:$0xff]
    %v136 = vld [vmem:[%s2 + $0x88] sm:$0xff]
    %v137 = vld [vmem:[%s2 + $0x90] sm:$0xff]
    %v138 = vld [vmem:[%s2 + $0x98] sm:$0xff]
    %v139 = vld [vmem:[%s2 + $0xa0] sm:$0xff]
    %v140 = vld [vmem:[%s2 + $0xa8] sm:$0xff]
    %v141 = vld [vmem:[%s2 + $0xb0] sm:$0xff]
    %v142 = vld [vmem:[%s2 + $0xb8] sm:$0xff]
    %v143 = vld [vmem:[%s2 + $0xc0] sm:$0xff]
    %v144 = vld [vmem:[%s2 + $0xc8] sm:$0xff]
    %v145 = vld [vmem:[%s2 + $0xd0] sm:$0xff]
    %v146 = vld [vmem:[%s2 + $0xd8] sm:$0xff]
    %v147 = vld [vmem:[%s2 + $0xe0] sm:$0xff]
    %v148 = vld [vmem:[%s2 + $0xe8] sm:$0xff]
    %v149 = vld [vmem:[%s2 + $0xf0] sm:$0xff]
    %v150 = vld [vmem:[%s2 + $0xf8] sm:$0xff]
    %v151 = vld [vmem:[%s2 + $0x100] sm:$0xff]
    %v152 = vld [vmem:[%s2 + $0x108] sm:$0xff]
    %v153 = vld [vmem:[%s2 + $0x110] sm:$0xff]
    %v154 = vld [vmem:[%s2 + $0x118] sm:$0xff]
    %v155 = vld [vmem:[%s2 + $0x120] sm:$0xff]
    %v156 = vld [vmem:[%s2 + $0x128] sm:$0xff]
    %v157 = vld [vmem:[%s2 + $0x130] sm:$0xff]
    %v158 = vld [vmem:[%s2 + $0x138] sm:$0xff]
    %v159 = vld [vmem:[%s2 + $0x140] sm:$0xff]
    %v160 = vld [vmem:[%s2 + $0x148] sm:$0xff]
    %v161 = vld [vmem:[%s2 + $0x150] sm:$0xff]
    %v162 = vld [vmem:[%s2 + $0x158] sm:$0xff]
    %v163 = vld [vmem:[%s2 + $0x160] sm:$0xff]
    %v164 = vld [vmem:[%s2 + $0x168] sm:$0xff]
    %v165 = vld [vmem:[%s2 + $0x170] sm:$0xff]
    %v166 = vld [vmem:[%s2 + $0x178] sm:$0xff]
    %v167 = vld [vmem:[%s2 + $0x180] sm:$0xff]
    %v168 = vld [vmem:[%s2 + $0x188] sm:$0xff]
    %v169 = vld [vmem:[%s2 + $0x190] sm:$0xff]
    %v170 = vld [vmem:[%s2 + $0x198] sm:$0xff]
    %v171 = vld [vmem:[%s2 + $0x1a0] sm:$0xff]
    %v172 = vld [vmem:[%s2 + $0x1a8] sm:$0xff]
    %v173 = vld [vmem:[%s2 + $0x1b0] sm:$0xff]
    %v174 = vld [vmem:[%s2 + $0x1b8] sm:$0xff]
    %v175 = vld [vmem:[%s2 + $0x1c0] sm:$0xff]
    %v176 = vld [vmem:[%s2 + $0x1c8] sm:$0xff]
    %v177 = vld [vmem:[%s2 + $0x1d0] sm:$0xff]
    %v178 = vld [vmem:[%s2 + $0x1d8] sm:$0xff]
    %v179 = vld [vmem:[%s2 + $0x1e0] sm:$0xff]
    %v180 = vld [vmem:[%s2 + $0x1e8] sm:$0xff]
    %v181 = vld [vmem:[%s2 + $0x1f0] sm:$0xff]
    %v182 = vld [vmem:[%s2 + $0x1f8] sm:$0xff]
    %v183 = vld [vmem:[%s2 + $0x200] sm:$0xff]
    %v184 = vld [vmem:[%s2 + $0x208] sm:$0xff]
    %v185 = vld [vmem:[%s2 + $0x210] sm:$0xff]
    %v186 = vld [vmem:[%s2 + $0x218] sm:$0xff]
    %v187 = vld [vmem:[%s2 + $0x220] sm:$0xff]
    %v188 = vld [vmem:[%s2 + $0x228] sm:$0xff]
    %v189 = vld [vmem:[%s2 + $0x230] sm:$0xff]
    %v190 = vld [vmem:[%s2 + $0x238] sm:$0xff]
    %v191 = vld [vmem:[%s2 + $0x240] sm:$0xff]
    %v192 = vld [vmem:[%s2 + $0x248] sm:$0xff]
    %v193 = vld [vmem:[%s2 + $0x250] sm:$0xff]
    %v194 = vld [vmem:[%s2 + $0x258] sm:$0xff]
    %v195 = vld [vmem:[%s2 + $0x260] sm:$0xff]
    %v196 = vld [vmem:[%s2 + $0x268] sm:$0xff]
    %v197 = vld [vmem:[%s2 + $0x270] sm:$0xff]
    %v198 = vld [vmem:[%s2 + $0x278] sm:$0xff]
    %v199 = vld [vmem:[%s2 + $0x280] sm:$0xff]
    %v200 = vld [vmem:[%s2 + $0x288] sm:$0xff]
    %v201 = vld [vmem:[%s2 + $0x290] sm:$0xff]
    %v202 = vld [vmem:[%s2 + $0x298] sm:$0xff]
    %v203 = vld [vmem:[%s2 + $0x2a0] sm:$0xff]
    %v204 = vld [vmem:[%s2 + $0x2a8] sm:$0xff]
    %v205 = vld [vmem:[%s2 + $0x2b0] sm:$0xff]
    %v206 = vld [vmem:[%s2 + $0x2b8] sm:$0xff]
    %v207 = vld [vmem:[%s2 + $0x2c0] sm:$0xff]
    %v208 = vld [vmem:[%s2 + $0x2c8] sm:$0xff]
    %v209 = vld [vmem:[%s2 + $0x2d0] sm:$0xff]
    %v210 = vld [vmem:[%s2 + $0x2d8] sm:$0xff]
    %v211 = vld [vmem:[%s2 + $0x2e0] sm:$0xff]
    %v212 = vld [vmem:[%s2 + $0x2e8] sm:$0xff]
    %v213 = vld [vmem:[%s2 + $0x2f0] sm:$0xff]
    %v214 = vld [vmem:[%s2 + $0x2f8] sm:$0xff]
    %v215 = vld [vmem:[%s2 + $0x300] sm:$0xff]
    %v216 = vld [vmem:[%s2 + $0x308] sm:$0xff]
    %v217 = vld [vmem:[%s2 + $0x310] sm:$0xff]
    %v218 = vld [vmem:[%s2 + $0x318] sm:$0xff]
    %v219 = vld [vmem:[%s2 + $0x320] sm:$0xff]
    %v220 = vld [vmem:[%s2 + $0x328] sm:$0xff]
    %v221 = vld [vmem:[%s2 + $0x330] sm:$0xff]
    %v222 = vld [vmem:[%s2 + $0x338] sm:$0xff]
    %v223 = vld [vmem:[%s2 + $0x340] sm:$0xff]
    %v224 = vld [vmem:[%s2 + $0x348] sm:$0xff]
    %v225 = vld [vmem:[%s2 + $0x350] sm:$0xff]
    %v226 = vld [vmem:[%s2 + $0x358] sm:$0xff]
    %v227 = vld [vmem:[%s2 + $0x360] sm:$0xff]
    %v228 = vld [vmem:[%s2 + $0x368] sm:$0xff]
    %v229 = vld [vmem:[%s2 + $0x370] sm:$0xff]
    %v230 = vld [vmem:[%s2 + $0x378] sm:$0xff]
    %v231 = vld [vmem:[%s2 + $0x380] sm:$0xff]
    %v232 = vld [vmem:[%s2 + $0x388] sm:$0xff]
    %v233 = vld [vmem:[%s2 + $0x390] sm:$0xff]
    %v234 = vld [vmem:[%s2 + $0x398] sm:$0xff]
    %v235 = vld [vmem:[%s2 + $0x3a0] sm:$0xff]
    %v236 = vld [vmem:[%s2 + $0x3a8] sm:$0xff]
    %v237 = vld [vmem:[%s2 + $0x3b0] sm:$0xff]
    %v238 = vld [vmem:[%s2 + $0x3b8] sm:$0xff]
    %v239 = vld [vmem:[%s2 + $0x3c0] sm:$0xff]
    %v240 = vld [vmem:[%s2 + $0x3c8] sm:$0xff]
    %v241 = vld [vmem:[%s2 + $0x3d0] sm:$0xff]
    %v242 = vld [vmem:[%s2 + $0x3d8] sm:$0xff]
    %v243 = vld [vmem:[%s2 + $0x3e0] sm:$0xff]
    %v244 = vld [vmem:[%s2 + $0x3e8] sm:$0xff]
    %v245 = vld [vmem:[%s2 + $0x3f0] sm:$0xff]
    %v246 = vld [vmem:[%s2 + $0x3f8] sm:$0xff]
    %247 = vmatprep.subr.mxu0 %v120
    %248 = vmatpush1.msra.mxu0 %v119
    %249 = vmatprep.subr.mxu0 %v122
    %250 = vmatpush1.msra.mxu0 %v121
    %251 = vmatprep.subr.mxu0 %v124
    %252 = vmatpush1.msra.mxu0 %v123
    %253 = vmatprep.subr.mxu0 %v126
    %254 = vmatpush1.msra.mxu0 %v125
    %255 = vmatprep.subr.mxu0 %v128
    %256 = vmatpush1.msra.mxu0 %v127
    %257 = vmatprep.subr.mxu0 %v130
    %258 = vmatpush1.msra.mxu0 %v129
    %259 = vmatprep.subr.mxu0 %v132
    %260 = vmatpush1.msra.mxu0 %v131
    %261 = vmatprep.subr.mxu0 %v134
    %262 = vmatpush1.msra.mxu0 %v133
    %263 = vmatprep.subr.mxu0 %v136
    %264 = vmatpush1.msra.mxu0 %v135
    %265 = vmatprep.subr.mxu0 %v138
    %266 = vmatpush1.msra.mxu0 %v137
    %267 = vmatprep.subr.mxu0 %v140
    %268 = vmatpush1.msra.mxu0 %v139
    %269 = vmatprep.subr.mxu0 %v142
    %270 = vmatpush1.msra.mxu0 %v141
    %271 = vmatprep.subr.mxu0 %v144
    %272 = vmatpush1.msra.mxu0 %v143
    %273 = vmatprep.subr.mxu0 %v146
    %274 = vmatpush1.msra.mxu0 %v145
    %275 = vmatprep.subr.mxu0 %v148
    %276 = vmatpush1.msra.mxu0 %v147
    %277 = vmatprep.subr.mxu0 %v150
    %278 = vmatpush1.msra.mxu0 %v149
    %279 = vmatprep.subr.mxu0 %v152
    %280 = vmatpush1.msra.mxu0 %v151
    %281 = vmatprep.subr.mxu0 %v154
    %282 = vmatpush1.msra.mxu0 %v153
    %283 = vmatprep.subr.mxu0 %v156
    %284 = vmatpush1.msra.mxu0 %v155
    %285 = vmatprep.subr.mxu0 %v158
    %286 = vmatpush1.msra.mxu0 %v157
    %287 = vmatprep.subr.mxu0 %v160
    %288 = vmatpush1.msra.mxu0 %v159
    %289 = vmatprep.subr.mxu0 %v162
    %290 = vmatpush1.msra.mxu0 %v161
    %291 = vmatprep.subr.mxu0 %v164
    %292 = vmatpush1.msra.mxu0 %v163
    %293 = vmatprep.subr.mxu0 %v166
    %294 = vmatpush1.msra.mxu0 %v165
    %295 = vmatprep.subr.mxu0 %v168
    %296 = vmatpush1.msra.mxu0 %v167
    %297 = vmatprep.subr.mxu0 %v170
    %298 = vmatpush1.msra.mxu0 %v169
    %299 = vmatprep.subr.mxu0 %v172
    %300 = vmatpush1.msra.mxu0 %v171
    %301 = vmatprep.subr.mxu0 %v174
    %302 = vmatpush1.msra.mxu0 %v173
    %303 = vmatprep.subr.mxu0 %v176
    %304 = vmatpush1.msra.mxu0 %v175
    %305 = vmatprep.subr.mxu0 %v178
    %306 = vmatpush1.msra.mxu0 %v177
    %307 = vmatprep.subr.mxu0 %v180
    %308 = vmatpush1.msra.mxu0 %v179
    %309 = vmatprep.subr.mxu0 %v182
    %310 = vmatpush1.msra.mxu0 %v181
    %311 = vmatprep.mubr.f32.mxu0 %v72
    %312 = vmatmul.mubr.f32.gmra.mrb[0].mxu0 %v71
    %v313 = vpop.f32.mrb[0].mxu0
    %v314 = vadd.f32 0.0, %v313
    %v315 = vpop.f32.mrb[0].mxu0
    %v316 = vadd.f32 0.0, %v315
    %317 = vmatprep.mubr.f32.mxu0 %v76
    %318 = vmatmul.mubr.f32.gmra.mrb[0].mxu0 %v75
    %v319 = vpop.f32.mrb[0].mxu0
    %v320 = vadd.f32 0.0, %v319
    %v321 = vpop.f32.mrb[0].mxu0
    %v322 = vadd.f32 0.0, %v321
    %323 = vmatprep.mubr.f32.mxu0 %v80
    %324 = vmatmul.mubr.f32.gmra.mrb[0].mxu0 %v79
    %v325 = vpop.f32.mrb[0].mxu0
    %v326 = vadd.f32 0.0, %v325
    %v327 = vpop.f32.mrb[0].mxu0
    %v328 = vadd.f32 0.0, %v327
    %329 = vmatprep.mubr.f32.mxu0 %v84
    %330 = vmatmul.mubr.f32.gmra.mrb[0].mxu0 %v83
    %v331 = vpop.f32.mrb[0].mxu0
    %v332 = vadd.f32 0.0, %v331
    %v333 = vpop.f32.mrb[0].mxu0
    %v334 = vadd.f32 0.0, %v333
    %335 = vmatprep.mubr.f32.mxu0 %v88
    %336 = vmatmul.mubr.f32.gmra.mrb[0].mxu0 %v87
    %v337 = vpop.f32.mrb[0].mxu0
    %v338 = vadd.f32 0.0, %v337
    %v339 = vpop.f32.mrb[0].mxu0
    %v340 = vadd.f32 0.0, %v339
    %341 = vmatprep.mubr.f32.mxu0 %v92
    %342 = vmatmul.mubr.f32.gmra.mrb[0].mxu0 %v91
    %v343 = vpop.f32.mrb[0].mxu0
    %v344 = vadd.f32 0.0, %v343
    %v345 = vpop.f32.mrb[0].mxu0
    %v346 = vadd.f32 0.0, %v345
    %347 = vmatprep.mubr.f32.mxu0 %v96
    %348 = vmatmul.mubr.f32.gmra.mrb[0].mxu0 %v95
    %v349 = vpop.f32.mrb[0].mxu0
    %v350 = vadd.f32 0.0, %v349
    %v351 = vpop.f32.mrb[0].mxu0
    %v352 = vadd.f32 0.0, %v351
    %353 = vmatprep.mubr.f32.mxu0 %v100
    %354 = vmatmul.mubr.f32.gmra.mrb[0].mxu0 %v99
    %v355 = vpop.f32.mrb[0].mxu0
    %v356 = vadd.f32 0.0, %v355
    %v357 = vpop.f32.mrb[0].mxu0
    %v358 = vadd.f32 0.0, %v357
    %359 = vdwg.mxu0
    %360 = vmatprep.subr.mxu0 %v184
    %361 = vmatpush1.msra.mxu0 %v183
    %362 = vmatprep.subr.mxu0 %v186
    %363 = vmatpush1.msra.mxu0 %v185
    %364 = vmatprep.subr.mxu0 %v188
    %365 = vmatpush1.msra.mxu0 %v187
    %366 = vmatprep.subr.mxu0 %v190
    %367 = vmatpush1.msra.mxu0 %v189
    %368 = vmatprep.subr.mxu0 %v192
    %369 = vmatpush1.msra.mxu0 %v191
    %370 = vmatprep.subr.mxu0 %v194
    %371 = vmatpush1.msra.mxu0 %v193
    %372 = vmatprep.subr.mxu0 %v196
    %373 = vmatpush1.msra.mxu0 %v195
    %374 = vmatprep.subr.mxu0 %v198
    %375 = vmatpush1.msra.mxu0 %v197
    %376 = vmatprep.subr.mxu0 %v200
    %377 = vmatpush1.msra.mxu0 %v199
    %378 = vmatprep.subr.mxu0 %v202
    %379 = vmatpush1.msra.mxu0 %v201
    %380 = vmatprep.subr.mxu0 %v204
    %381 = vmatpush1.msra.mxu0 %v203
    %382 = vmatprep.subr.mxu0 %v206
    %383 = vmatpush1.msra.mxu0 %v205
    %384 = vmatprep.subr.mxu0 %v208
    %385 = vmatpush1.msra.mxu0 %v207
    %386 = vmatprep.subr.mxu0 %v210
    %387 = vmatpush1.msra.mxu0 %v209
    %388 = vmatprep.subr.mxu0 %v212
    %389 = vmatpush1.msra.mxu0 %v211
    %390 = vmatprep.subr.mxu0 %v214
    %391 = vmatpush1.msra.mxu0 %v213
    %392 = vmatprep.subr.mxu0 %v216
    %393 = vmatpush1.msra.mxu0 %v215
    %394 = vmatprep.subr.mxu0 %v218
    %395 = vmatpush1.msra.mxu0 %v217
    %396 = vmatprep.subr.mxu0 %v220
    %397 = vmatpush1.msra.mxu0 %v219
    %398 = vmatprep.subr.mxu0 %v222
    %399 = vmatpush1.msra.mxu0 %v221
    %400 = vmatprep.subr.mxu0 %v224
    %401 = vmatpush1.msra.mxu0 %v223
    %402 = vmatprep.subr.mxu0 %v226
    %403 = vmatpush1.msra.mxu0 %v225
    %404 = vmatprep.subr.mxu0 %v228
    %405 = vmatpush1.msra.mxu0 %v227
    %406 = vmatprep.subr.mxu0 %v230
    %407 = vmatpush1.msra.mxu0 %v229
    %408 = vmatprep.subr.mxu0 %v232
    %409 = vmatpush1.msra.mxu0 %v231
    %410 = vmatprep.subr.mxu0 %v234
    %411 = vmatpush1.msra.mxu0 %v233
    %412 = vmatprep.subr.mxu0 %v236
    %413 = vmatpush1.msra.mxu0 %v235
    %414 = vmatprep.subr.mxu0 %v238
    %415 = vmatpush1.msra.mxu0 %v237
    %416 = vmatprep.subr.mxu0 %v240
    %417 = vmatpush1.msra.mxu0 %v239
    %418 = vmatprep.subr.mxu0 %v242
    %419 = vmatpush1.msra.mxu0 %v241
    %420 = vmatprep.subr.mxu0 %v244
    %421 = vmatpush1.msra.mxu0 %v243
    %422 = vmatprep.subr.mxu0 %v246
    %423 = vmatpush1.msra.mxu0 %v245
    %424 = vmatprep.mubr.f32.mxu0 %v74
    %425 = vmatmul.mubr.f32.gmra.mrb[0].mxu0 %v73
    %v426 = vpop.f32.mrb[0].mxu0
    %v427 = vadd.f32 %v314, %v426
    %v428 = vpop.f32.mrb[0].mxu0
    %v429 = vadd.f32 %v316, %v428
    %430 = vmatprep.mubr.f32.mxu0 %v78
    %431 = vmatmul.mubr.f32.gmra.mrb[0].mxu0 %v77
    %v432 = vpop.f32.mrb[0].mxu0
    %v433 = vadd.f32 %v320, %v432
    %v434 = vpop.f32.mrb[0].mxu0
    %v435 = vadd.f32 %v322, %v434
    %436 = vmatprep.mubr.f32.mxu0 %v82
    %437 = vmatmul.mubr.f32.gmra.mrb[0].mxu0 %v81
    %v438 = vpop.f32.mrb[0].mxu0
    %v439 = vadd.f32 %v326, %v438
    %v440 = vpop.f32.mrb[0].mxu0
    %v441 = vadd.f32 %v328, %v440
    %442 = vmatprep.mubr.f32.mxu0 %v86
    %443 = vmatmul.mubr.f32.gmra.mrb[0].mxu0 %v85
    %v444 = vpop.f32.mrb[0].mxu0
    %v445 = vadd.f32 %v332, %v444
    %v446 = vpop.f32.mrb[0].mxu0
    %v447 = vadd.f32 %v334, %v446
    %448 = vmatprep.mubr.f32.mxu0 %v90
    %449 = vmatmul.mubr.f32.gmra.mrb[0].mxu0 %v89
    %v450 = vpop.f32.mrb[0].mxu0
    %v451 = vadd.f32 %v338, %v450
    %v452 = vpop.f32.mrb[0].mxu0
    %v453 = vadd.f32 %v340, %v452
    %454 = vmatprep.mubr.f32.mxu0 %v94
    %455 = vmatmul.mubr.f32.gmra.mrb[0].mxu0 %v93
    %v456 = vpop.f32.mrb[0].mxu0
    %v457 = vadd.f32 %v344, %v456
    %v458 = vpop.f32.mrb[0].mxu0
    %v459 = vadd.f32 %v346, %v458
    %460 = vmatprep.mubr.f32.mxu0 %v98
    %461 = vmatmul.mubr.f32.gmra.mrb[0].mxu0 %v97
    %v462 = vpop.f32.mrb[0].mxu0
    %v463 = vadd.f32 %v350, %v462
    %v464 = vpop.f32.mrb[0].mxu0
    %v465 = vadd.f32 %v352, %v464
    %466 = vmatprep.mubr.f32.mxu0 %v102
    %467 = vmatmul.mubr.f32.gmra.mrb[0].mxu0 %v101
    %v468 = vpop.f32.mrb[0].mxu0
    %v469 = vadd.f32 %v356, %v468
    %v470 = vpop.f32.mrb[0].mxu0
    %v471 = vadd.f32 %v358, %v470
    %472 = vdwg.mxu0
    %v473 = vadd.f32 %v103, %v427
    %v474 = vadd.f32 %v104, %v429
    %v475 = vadd.f32 %v105, %v433
    %v476 = vadd.f32 %v106, %v435
    %v477 = vadd.f32 %v107, %v439
    %v478 = vadd.f32 %v108, %v441
    %v479 = vadd.f32 %v109, %v445
    %v480 = vadd.f32 %v110, %v447
    %v481 = vadd.f32 %v111, %v451
    %v482 = vadd.f32 %v112, %v453
    %v483 = vadd.f32 %v113, %v457
    %v484 = vadd.f32 %v114, %v459
    %v485 = vadd.f32 %v115, %v463
    %v486 = vadd.f32 %v116, %v465
    %v487 = vadd.f32 %v117, %v469
    %v488 = vadd.f32 %v118, %v471
    %489 = vst [vmem:[#allocation3] sm:$0xff] %v473
    %490 = vst [vmem:[#allocation3 + $0x8] sm:$0xff] %v474
    %491 = vst [vmem:[#allocation3 + $0x10] sm:$0xff] %v475
    %492 = vst [vmem:[#allocation3 + $0x18] sm:$0xff] %v476
    %493 = vst [vmem:[#allocation3 + $0x20] sm:$0xff] %v477
    %494 = vst [vmem:[#allocation3 + $0x28] sm:$0xff] %v478
    %495 = vst [vmem:[#allocation3 + $0x30] sm:$0xff] %v479
    %496 = vst [vmem:[#allocation3 + $0x38] sm:$0xff] %v480
    %497 = vst [vmem:[#allocation3 + $0x40] sm:$0xff] %v481
    %498 = vst [vmem:[#allocation3 + $0x48] sm:$0xff] %v482
    %499 = vst [vmem:[#allocation3 + $0x50] sm:$0xff] %v483
    %500 = vst [vmem:[#allocation3 + $0x58] sm:$0xff] %v484
    %501 = vst [vmem:[#allocation3 + $0x60] sm:$0xff] %v485
    %502 = vst [vmem:[#allocation3 + $0x68] sm:$0xff] %v486
    %503 = vst [vmem:[#allocation3 + $0x70] sm:$0xff] %v487
    %504 = vst [vmem:[#allocation3 + $0x78] sm:$0xff] %v488
    // Predicated region
    $region22: #{_fc_layer_forward_impl.1} parent=1 // pred_check
      %p505 = pneg %p19
    $region23: #{_fc_layer_forward_impl.1} parent=1 // pred_check_branch
      %507 = sbr.rel (%p505) target = $region25
    $region24: #{_fc_layer_forward_impl.1} parent=1 // pred_region
      %v508 = vld [vmem:[#allocation3] sm:$0xff]
      %v509 = vld [vmem:[#allocation3 + $0x8] sm:$0xff]
      %v510 = vld [vmem:[#allocation3 + $0x10] sm:$0xff]
      %v511 = vld [vmem:[#allocation3 + $0x18] sm:$0xff]
      %v512 = vld [vmem:[#allocation3 + $0x20] sm:$0xff]
      %v513 = vld [vmem:[#allocation3 + $0x28] sm:$0xff]
      %v514 = vld [vmem:[#allocation3 + $0x30] sm:$0xff]
      %v515 = vld [vmem:[#allocation3 + $0x38] sm:$0xff]
      %v516 = vld [vmem:[#allocation3 + $0x40] sm:$0xff]
      %v517 = vld [vmem:[#allocation3 + $0x48] sm:$0xff]
      %v518 = vld [vmem:[#allocation3 + $0x50] sm:$0xff]
      %v519 = vld [vmem:[#allocation3 + $0x58] sm:$0xff]
      %v520 = vld [vmem:[#allocation3 + $0x60] sm:$0xff]
      %v521 = vld [vmem:[#allocation3 + $0x68] sm:$0xff]
      %v522 = vld [vmem:[#allocation3 + $0x70] sm:$0xff]
      %v523 = vld [vmem:[#allocation3 + $0x78] sm:$0xff]
      %s524 = sld [smem:[#allocation2]]
      %v525 = vstv %s524
      %v526 = vmul.f32 %v508, %v525
      %v527 = vmul.f32 %v509, %v525
      %v528 = vmul.f32 %v510, %v525
      %v529 = vmul.f32 %v511, %v525
      %v530 = vmul.f32 %v512, %v525
      %v531 = vmul.f32 %v513, %v525
      %v532 = vmul.f32 %v514, %v525
      %v533 = vmul.f32 %v515, %v525
      %v534 = vmul.f32 %v516, %v525
      %v535 = vmul.f32 %v517, %v525
      %v536 = vmul.f32 %v518, %v525
      %v537 = vmul.f32 %v519, %v525
      %v538 = vmul.f32 %v520, %v525
      %v539 = vmul.f32 %v521, %v525
      %v540 = vmul.f32 %v522, %v525
      %v541 = vmul.f32 %v523, %v525
      %v542 = vld [vmem:[%s3] sm:$0x3]
      %v544 = vlaneseq
      %v545 = vshrl.u32 %v544, 7
      %v546 = vsub.s32 0, %v545
      %v547 = vrot.slane %v542, %v546
      %v548 = vlaneseq
      %v549 = vshrl.u32 %v548, 7
      %v550 = vsub.s32 1, %v549
      %v551 = vrot.slane %v542, %v550
      %v554 = vadd.f32 %v526, %v547
      %v555 = vadd.f32 %v527, %v551
      %v556 = vadd.f32 %v528, %v547
      %v557 = vadd.f32 %v529, %v551
      %v558 = vadd.f32 %v530, %v547
      %v559 = vadd.f32 %v531, %v551
      %v560 = vadd.f32 %v532, %v547
      %v561 = vadd.f32 %v533, %v551
      %v562 = vadd.f32 %v534, %v547
      %v563 = vadd.f32 %v535, %v551
      %v564 = vadd.f32 %v536, %v547
      %v565 = vadd.f32 %v537, %v551
      %v566 = vadd.f32 %v538, %v547
      %v567 = vadd.f32 %v539, %v551
      %v568 = vadd.f32 %v540, %v547
      %v569 = vadd.f32 %v541, %v551
      %570 = vst [vmem:[#allocation3] sm:$0xff] %v554
      %571 = vst [vmem:[#allocation3 + $0x8] sm:$0xff] %v555
      %572 = vst [vmem:[#allocation3 + $0x10] sm:$0xff] %v556
      %573 = vst [vmem:[#allocation3 + $0x18] sm:$0xff] %v557
      %574 = vst [vmem:[#allocation3 + $0x20] sm:$0xff] %v558
      %575 = vst [vmem:[#allocation3 + $0x28] sm:$0xff] %v559
      %576 = vst [vmem:[#allocation3 + $0x30] sm:$0xff] %v560
      %577 = vst [vmem:[#allocation3 + $0x38] sm:$0xff] %v561
      %578 = vst [vmem:[#allocation3 + $0x40] sm:$0xff] %v562
      %579 = vst [vmem:[#allocation3 + $0x48] sm:$0xff] %v563
      %580 = vst [vmem:[#allocation3 + $0x50] sm:$0xff] %v564
      %581 = vst [vmem:[#allocation3 + $0x58] sm:$0xff] %v565
      %582 = vst [vmem:[#allocation3 + $0x60] sm:$0xff] %v566
      %583 = vst [vmem:[#allocation3 + $0x68] sm:$0xff] %v567
      %584 = vst [vmem:[#allocation3 + $0x70] sm:$0xff] %v568
      %585 = vst [vmem:[#allocation3 + $0x78] sm:$0xff] %v569
    $region25: #{_fc_layer_forward_impl.1} parent=1 // pred_fallthru
      _
    // Predicated region
    $region26: #{_fc_layer_forward_impl.1} parent=1 // pred_check
      _
    $region27: #{_fc_layer_forward_impl.1} parent=1 // pred_check_branch
      %587 = sbr.rel (0) target = $region29
    $region28: #{_fc_layer_forward_impl.1} parent=1 // pred_region
      %s589 = ssub.s32 2048, 2048
      %590 = vsyncadd [#allocation4], %s589
      %s591 = sshll.u32 [#allocation3], 4
      %s592 = int_to_ptr.vmem [resolvable:$true] %s591
      %597 = dma.vmem_to_hbm [thread:$0]  %s592, 2048, %s4, [#allocation4], 256, 256, 16
    $region29: #{_fc_layer_forward_impl.1} parent=1 // pred_fallthru
      _
    // Predicated region
    $region30: #{_fc_layer_forward_impl.1} parent=1 // pred_check
      _
    $region31: #{_fc_layer_forward_impl.1} parent=1 // pred_check_branch
      %599 = sbr.rel (0) target = $region33
    $region32: #{_fc_layer_forward_impl.1} parent=1 // pred_region
      %600 = dma.done [#allocation4], 2048
    $region33: #{_fc_layer_forward_impl.1} parent=1 // pred_fallthru
      _
    %601 = vsyncpa [#allocation4], 1

</llo_original>
